<compile_context>
chip_gen: v6e
topology: v6e:2x2x1
jax: 0.10.0
libtpu: 0.0.40
codegen_flags: <defaults>
</compile_context>

<pallas_src>
import jax
import jax.numpy as jnp
from jax import lax
from jax.experimental import pallas as pl
from jax.experimental.pallas import tpu as pltpu

IM_DIM = 64
HIDDEN_DIM = 32
BATCH = 8

_LANE = 128      # vreg lane width
_SUBLANE = 8     # f32 sublane count


def _round_up(x, m):
    return ((x + m - 1) // m) * m


def _leaky_relu(v, slope=0.2):
    return jnp.where(v > 0, v, slope * v)


def disc_kernel(x_ref, w1_ref, w23_ref, w4_ref, b_ref, o_ref):
    """One batch tile of the fused 4-layer MLP.

    x_ref:   (tb, im_dim) bf16 batch tile (feature dim unpadded).
    w1_ref:  (im_dim, Hp) bf16 resident.
    w23_ref: (2, Hp, Hp)  bf16 resident (layers 2 and 3 stacked).
    w4_ref:  (1, Hp)      f32 resident (last layer's weight as a row).
    b_ref:   (4, Hp)      f32 resident (biases; row 3 holds b4 in lane 0).
    o_ref:   (1, tb)      f32 transposed output row (lane-dense store).
    """
    # Layer 1: (tb, im_dim) @ (im_dim, Hp), f32 accumulate on the MXU.
    h = jnp.dot(x_ref[...], w1_ref[...], preferred_element_type=jnp.float32)
    h = _leaky_relu(h + b_ref[0:1, :])

    # Layer 2.
    h = jnp.dot(h.astype(w23_ref.dtype), w23_ref[0],
                preferred_element_type=jnp.float32)
    h = _leaky_relu(h + b_ref[1:2, :])

    # Layer 3.
    h = jnp.dot(h.astype(w23_ref.dtype), w23_ref[1],
                preferred_element_type=jnp.float32)
    h = _leaky_relu(h + b_ref[2:3, :])

    # Layer 4: transposed (1, tb) row result so the HBM writeback is ~4 B/row.
    # Contract w4_row (1, Hp) against h (tb, Hp) over the hidden dim.
    out_row = lax.dot_general(
        w4_ref[...], h,
        dimension_numbers=(((1,), (1,)), ((), ())),
        preferred_element_type=jnp.float32)
    o_ref[...] = out_row + b_ref[3:4, 0:1]


def init_params(key, im_dim, hidden_dim):
    """Deterministic PyTorch-style uniform init for the 4 Linear layers.

    Weights are returned already transposed to (in_features, out_features),
    biases shaped (1, out_features)."""
    dims = [(im_dim, hidden_dim * 4),
            (hidden_dim * 4, hidden_dim * 2),
            (hidden_dim * 2, hidden_dim),
            (hidden_dim, 1)]
    params = []
    for i, (fan_in, fan_out) in enumerate(dims):
        kw, kb = jax.random.split(jax.random.fold_in(key, i))
        bound = 1.0 / (fan_in ** 0.5)
        w = jax.random.uniform(kw, (fan_in, fan_out), jnp.float32, -bound, bound)
        b = jax.random.uniform(kb, (1, fan_out), jnp.float32, -bound, bound)
        params.append((w, b))
    return params


def discriminator_forward(x, params, *, tb=1024, compute_dtype=jnp.bfloat16):
    """Fused discriminator forward: (B, im_dim) -> (B, 1)."""
    B, im_dim = x.shape
    (w1, b1), (w2, b2), (w3, b3), (w4, b4) = params
    d1, d2, d3 = w1.shape[1], w2.shape[1], w3.shape[1]
    # Common padded hidden width (128 for the default GAN sizes).
    Hp = _round_up(max(d1, d2, d3, _LANE), _LANE)

    # ---- Batch tiling ----------------------------------------------------
    # Pad B only to a sublane multiple; the last grid tile may be partial.
    B8 = _round_up(B, _SUBLANE)
    tb_cap = max(_LANE, _round_up(min(tb, 1024), _LANE))
    if B8 <= 2 * _LANE:
        tb_eff = B8                      # single tile; block dims == array dims
    else:
        # >= 2 tiles (v7x megacore split) with a lane-multiple tile size,
        # capped at tb_cap (bigger tiles amortize the ~0.35us/step overhead).
        tb_eff = min(tb_cap, _round_up((B8 + 1) // 2, _LANE))
    grid = (pl.cdiv(B8, tb_eff),)

    # ---- Operand preparation (zero padding keeps the math exact) ---------
    xp = jnp.pad(x, ((0, B8 - B), (0, 0))).astype(compute_dtype)   # feature dim unpadded
    w1p = jnp.pad(w1, ((0, 0), (0, Hp - d1))).astype(compute_dtype)
    w2p = jnp.pad(w2, ((0, Hp - w2.shape[0]), (0, Hp - d2)))
    w3p = jnp.pad(w3, ((0, Hp - w3.shape[0]), (0, Hp - d3)))
    w23 = jnp.stack([w2p, w3p]).astype(compute_dtype)              # (2, Hp, Hp)
    w4row = jnp.pad(w4.reshape(-1)[None, :],
                    ((0, 0), (0, Hp - w4.shape[0]))).astype(jnp.float32)  # (1, Hp)
    bias = jnp.stack([
        jnp.pad(b1.reshape(-1), (0, Hp - d1)),
        jnp.pad(b2.reshape(-1), (0, Hp - d2)),
        jnp.pad(b3.reshape(-1), (0, Hp - d3)),
        jnp.pad(b4.reshape(-1), (0, Hp - b4.size)),
    ]).astype(jnp.float32)                                         # (4, Hp)

    flops = 2 * B8 * (im_dim * Hp + 2 * Hp * Hp + Hp)
    bytes_accessed = (
        xp.size * xp.dtype.itemsize
        + w1p.size * w1p.dtype.itemsize
        + w23.size * w23.dtype.itemsize
        + w4row.size * 4 + bias.size * 4
        + B8 * 4)                                                  # (1, B8) f32 out

    out_row = pl.pallas_call(
        disc_kernel,
        out_shape=jax.ShapeDtypeStruct((1, B8), jnp.float32),
        grid=grid,
        in_specs=[
            pl.BlockSpec((tb_eff, im_dim), lambda i: (i, 0)),   # streamed batch tile
            pl.BlockSpec((im_dim, Hp), lambda i: (0, 0)),       # resident w1
            pl.BlockSpec((2, Hp, Hp), lambda i: (0, 0, 0)),     # resident w2/w3
            pl.BlockSpec((1, Hp), lambda i: (0, 0)),            # resident w4 row
            pl.BlockSpec((4, Hp), lambda i: (0, 0)),            # resident biases
        ],
        out_specs=pl.BlockSpec((1, tb_eff), lambda i: (0, i)),
        compiler_params=pltpu.CompilerParams(
            dimension_semantics=("parallel",)),
        cost_estimate=pl.CostEstimate(
            flops=flops, transcendentals=0, bytes_accessed=bytes_accessed),
    )(xp, w1p, w23, w4row, bias)

    return out_row[0, :B][:, None]


def discriminator_ref(x, params, compute_dtype=jnp.bfloat16):
    """Pure-JAX reference with the same mixed-precision recipe as the kernel."""
    (w1, b1), (w2, b2), (w3, b3), (w4, b4) = params
    cd = compute_dtype
    h = jnp.dot(x.astype(cd), w1.astype(cd),
                preferred_element_type=jnp.float32) + b1.reshape(1, -1)
    h = _leaky_relu(h)
    h = jnp.dot(h.astype(cd), w2.astype(cd),
                preferred_element_type=jnp.float32) + b2.reshape(1, -1)
    h = _leaky_relu(h)
    h = jnp.dot(h.astype(cd), w3.astype(cd),
                preferred_element_type=jnp.float32) + b3.reshape(1, -1)
    h = _leaky_relu(h)
    return jnp.dot(h, w4, preferred_element_type=jnp.float32) + b4.reshape(1, -1)


if __name__ == "__main__":
    key = jax.random.PRNGKey(0)
    k_x, k_p = jax.random.split(key)
    params = init_params(k_p, IM_DIM, HIDDEN_DIM)

    # Small demo batch (single grid tile, block dims == full array dims).
    x = jax.random.normal(k_x, (BATCH, IM_DIM), jnp.float32)
    out = jax.block_until_ready(discriminator_forward(x, params))
    ref = discriminator_ref(x, params)
    assert out.shape == (BATCH, 1), out.shape
    assert jnp.allclose(out, ref, atol=2e-2, rtol=2e-2), (
        float(jnp.max(jnp.abs(out - ref))))

    # Non-multiple batch: exercises >=2 batch tiles, a partial last tile,
    # and the transposed lane-dense output path.
    x2 = jax.random.normal(jax.random.fold_in(k_x, 1), (300, IM_DIM), jnp.float32)
    out2 = jax.block_until_ready(discriminator_forward(x2, params, tb=1024))
    ref2 = discriminator_ref(x2, params)
    assert out2.shape == (300, 1), out2.shape
    assert jnp.allclose(out2, ref2, atol=2e-2, rtol=2e-2), (
        float(jnp.max(jnp.abs(out2 - ref2))))

    print("KERNEL_OK")
</pallas_src>

<mosaic_0001>
module attributes {stable_mosaic.version = 11 : i64} {
  func.func @disc_kernel(%arg0: i32, %arg1: memref<8x64xbf16, #tpu.memory_space<vmem>>, %arg2: memref<64x128xbf16, #tpu.memory_space<vmem>>, %arg3: memref<2x128x128xbf16, #tpu.memory_space<vmem>>, %arg4: memref<1x128xf32, #tpu.memory_space<vmem>>, %arg5: memref<4x128xf32, #tpu.memory_space<vmem>>, %arg6: memref<1x8xf32, #tpu.memory_space<vmem>>) attributes {dimension_semantics = [#tpu.dimension_semantics<parallel>], iteration_bounds = array<i64: 1>, scalar_prefetch = 0 : i64, scratch_operands = 0 : i64, tpu.core_type = #tpu.core_type<tc>, window_params = [{transform_indices = @transform_0, window_bounds = array<i64: 8, 64>}, {pipeline_mode = #tpu.pipeline_mode<synchronous>, transform_indices = @transform_1, window_bounds = array<i64: 64, 128>}, {pipeline_mode = #tpu.pipeline_mode<synchronous>, transform_indices = @transform_2, window_bounds = array<i64: 2, 128, 128>}, {pipeline_mode = #tpu.pipeline_mode<synchronous>, transform_indices = @transform_3, window_bounds = array<i64: 1, 128>}, {pipeline_mode = #tpu.pipeline_mode<synchronous>, transform_indices = @transform_4, window_bounds = array<i64: 4, 128>}, {transform_indices = @transform_5, window_bounds = array<i64: 1, 8>}]} {
    %c0 = arith.constant 0 : index
    %c0_0 = arith.constant 0 : index
    %0 = vector.load %arg1[%c0, %c0_0] : memref<8x64xbf16, #tpu.memory_space<vmem>>, vector<8x64xbf16>
    %c0_1 = arith.constant 0 : index
    %c0_2 = arith.constant 0 : index
    %1 = vector.load %arg2[%c0_1, %c0_2] : memref<64x128xbf16, #tpu.memory_space<vmem>>, vector<64x128xbf16>
    %cst = arith.constant dense<0.000000e+00> : vector<8x128xf32>
    %2 = tpu.matmul %0, %1, %cst {dimension_numbers = #tpu.dot_dimension_numbers<[1], [0], [0], [1], [0, 0, 1, 1], [], []>} : vector<8x64xbf16>, vector<64x128xbf16>, vector<8x128xf32> -> vector<8x128xf32>
    %c0_3 = arith.constant 0 : index
    %c0_4 = arith.constant 0 : index
    %3 = vector.load %arg5[%c0_3, %c0_4] : memref<4x128xf32, #tpu.memory_space<vmem>>, vector<1x128xf32>
    %4 = vector.broadcast %3 : vector<1x128xf32> to vector<8x128xf32>
    %5 = arith.addf %2, %4 : vector<8x128xf32>
    %cst_5 = arith.constant 0.000000e+00 : f32
    %6 = vector.broadcast %cst_5 : f32 to vector<8x128xf32>
    %7 = arith.cmpf ogt, %5, %6 : vector<8x128xf32>
    %cst_6 = arith.constant 2.000000e-01 : f32
    %8 = vector.broadcast %cst_6 : f32 to vector<8x128xf32>
    %9 = arith.mulf %8, %5 : vector<8x128xf32>
    %10 = arith.select %7, %5, %9 : vector<8x128xi1>, vector<8x128xf32>
    %11 = arith.truncf %10 : vector<8x128xf32> to vector<8x128xbf16>
    %c0_7 = arith.constant 0 : index
    %c0_8 = arith.constant 0 : index
    %c0_9 = arith.constant 0 : index
    %12 = vector.load %arg3[%c0_7, %c0_8, %c0_9] : memref<2x128x128xbf16, #tpu.memory_space<vmem>>, vector<1x128x128xbf16>
    %13 = vector.shape_cast %12 : vector<1x128x128xbf16> to vector<128x128xbf16>
    %cst_10 = arith.constant dense<0.000000e+00> : vector<8x128xf32>
    %14 = tpu.matmul %11, %13, %cst_10 {dimension_numbers = #tpu.dot_dimension_numbers<[1], [0], [0], [1], [0, 0, 1, 1], [], []>} : vector<8x128xbf16>, vector<128x128xbf16>, vector<8x128xf32> -> vector<8x128xf32>
    %c1 = arith.constant 1 : index
    %c0_11 = arith.constant 0 : index
    %15 = vector.load %arg5[%c1, %c0_11] : memref<4x128xf32, #tpu.memory_space<vmem>>, vector<1x128xf32>
    %16 = vector.broadcast %15 : vector<1x128xf32> to vector<8x128xf32>
    %17 = arith.addf %14, %16 : vector<8x128xf32>
    %cst_12 = arith.constant 0.000000e+00 : f32
    %18 = vector.broadcast %cst_12 : f32 to vector<8x128xf32>
    %19 = arith.cmpf ogt, %17, %18 : vector<8x128xf32>
    %cst_13 = arith.constant 2.000000e-01 : f32
    %20 = vector.broadcast %cst_13 : f32 to vector<8x128xf32>
    %21 = arith.mulf %20, %17 : vector<8x128xf32>
    %22 = arith.select %19, %17, %21 : vector<8x128xi1>, vector<8x128xf32>
    %23 = arith.truncf %22 : vector<8x128xf32> to vector<8x128xbf16>
    %c1_14 = arith.constant 1 : index
    %c0_15 = arith.constant 0 : index
    %c0_16 = arith.constant 0 : index
    %24 = vector.load %arg3[%c1_14, %c0_15, %c0_16] : memref<2x128x128xbf16, #tpu.memory_space<vmem>>, vector<1x128x128xbf16>
    %25 = vector.shape_cast %24 : vector<1x128x128xbf16> to vector<128x128xbf16>
    %cst_17 = arith.constant dense<0.000000e+00> : vector<8x128xf32>
    %26 = tpu.matmul %23, %25, %cst_17 {dimension_numbers = #tpu.dot_dimension_numbers<[1], [0], [0], [1], [0, 0, 1, 1], [], []>} : vector<8x128xbf16>, vector<128x128xbf16>, vector<8x128xf32> -> vector<8x128xf32>
    %c2 = arith.constant 2 : index
    %c0_18 = arith.constant 0 : index
    %27 = vector.load %arg5[%c2, %c0_18] : memref<4x128xf32, #tpu.memory_space<vmem>>, vector<1x128xf32>
    %28 = vector.broadcast %27 : vector<1x128xf32> to vector<8x128xf32>
    %29 = arith.addf %26, %28 : vector<8x128xf32>
    %cst_19 = arith.constant 0.000000e+00 : f32
    %30 = vector.broadcast %cst_19 : f32 to vector<8x128xf32>
    %31 = arith.cmpf ogt, %29, %30 : vector<8x128xf32>
    %cst_20 = arith.constant 2.000000e-01 : f32
    %32 = vector.broadcast %cst_20 : f32 to vector<8x128xf32>
    %33 = arith.mulf %32, %29 : vector<8x128xf32>
    %34 = arith.select %31, %29, %33 : vector<8x128xi1>, vector<8x128xf32>
    %c0_21 = arith.constant 0 : index
    %c0_22 = arith.constant 0 : index
    %35 = vector.load %arg4[%c0_21, %c0_22] : memref<1x128xf32, #tpu.memory_space<vmem>>, vector<1x128xf32>
    %cst_23 = arith.constant dense<0.000000e+00> : vector<1x8xf32>
    %36 = tpu.matmul %35, %34, %cst_23 {dimension_numbers = #tpu.dot_dimension_numbers<[1], [1], [0], [0], [0, 0, 1, 0], [], []>} : vector<1x128xf32>, vector<8x128xf32>, vector<1x8xf32> -> vector<1x8xf32>
    %c3 = arith.constant 3 : index
    %c0_24 = arith.constant 0 : index
    %37 = vector.load %arg5[%c3, %c0_24] : memref<4x128xf32, #tpu.memory_space<vmem>>, vector<1x1xf32>
    %38 = vector.broadcast %37 : vector<1x1xf32> to vector<1x8xf32>
    %39 = arith.addf %36, %38 : vector<1x8xf32>
    %c0_25 = arith.constant 0 : index
    %c0_26 = arith.constant 0 : index
    %40 = vector.load %arg6[%c0_25, %c0_26] : memref<1x8xf32, #tpu.memory_space<vmem>>, vector<1x8xf32>
    tpu.vector_store %arg6[%c0_25, %c0_26], %39 {strides = array<i32>} : memref<1x8xf32, #tpu.memory_space<vmem>>, vector<1x8xf32>,
    return
  }
  func.func @transform_0(%arg0: i32) -> (i32, i32) {
    %c0_i32 = arith.constant 0 : i32
    %c0_i32_0 = arith.constant 0 : i32
    return %arg0, %c0_i32 : i32, i32
  }
  func.func @transform_1(%arg0: i32) -> (i32, i32) {
    %c0_i32 = arith.constant 0 : i32
    %c0_i32_0 = arith.constant 0 : i32
    %c0_i32_1 = arith.constant 0 : i32
    return %c0_i32, %c0_i32_0 : i32, i32
  }
  func.func @transform_2(%arg0: i32) -> (i32, i32, i32) {
    %c0_i32 = arith.constant 0 : i32
    %c0_i32_0 = arith.constant 0 : i32
    %c0_i32_1 = arith.constant 0 : i32
    %c0_i32_2 = arith.constant 0 : i32
    return %c0_i32, %c0_i32_0, %c0_i32_1 : i32, i32, i32
  }
  func.func @transform_3(%arg0: i32) -> (i32, i32) {
    %c0_i32 = arith.constant 0 : i32
    %c0_i32_0 = arith.constant 0 : i32
    %c0_i32_1 = arith.constant 0 : i32
    return %c0_i32, %c0_i32_0 : i32, i32
  }
  func.func @transform_4(%arg0: i32) -> (i32, i32) {
    %c0_i32 = arith.constant 0 : i32
    %c0_i32_0 = arith.constant 0 : i32
    %c0_i32_1 = arith.constant 0 : i32
    return %c0_i32, %c0_i32_0 : i32, i32
  }
  func.func @transform_5(%arg0: i32) -> (i32, i32) {
    %c0_i32 = arith.constant 0 : i32
    %c0_i32_0 = arith.constant 0 : i32
    return %c0_i32, %arg0 : i32, i32
  }
}

</mosaic_0001>

<llo_original>
// kernel: tpu_custom_call.1
$region0: #{tpu_custom_call.1}
  #allocation0 [shape = 'u32[]', space=smem, size = 0x4, offset = 0x4, fixed_abs, tag = 'smem constant byte address 0x4 - core index']
  #allocation1 [shape = 'u32[144,128]{1,0:T(1,128)}', space=vmem, size = 0x12000, scoped, tag = 'internal scratch']
  %s0 = inlined_call_operand.hbm [shape: bf16[8,64], index: 0, kind: input, shape index: {}]
  %s1 = inlined_call_operand.hbm [shape: bf16[64,128], index: 1, kind: input, shape index: {}]
  %s2 = inlined_call_operand.hbm [shape: bf16[2,128,128], index: 2, kind: input, shape index: {}]
  %s3 = inlined_call_operand.vmem [shape: f32[1,128], index: 3, kind: input, shape index: {}]
  %s4 = inlined_call_operand.vmem [shape: f32[4,128], index: 4, kind: input, shape index: {}]
  %s5 = inlined_call_operand.hbm [shape: f32[1,8], index: 5, kind: output, shape index: {}]
  %s6 = sld [smem:[#allocation0]]
  $region42: #{tpu_custom_call.1} parent=0
    _
  %s8 = ssub.s32 1, %s6
  %s9 = scalar_select 0, %s8, %s6
  $region1: #{tpu_custom_call.1} parent=0
    #allocation2 [shape = 'u8[2048]{0}', space=vmem, size = 0x800, scoped, tag = 'input window, operand 0, single buffered']
    #allocation3 [shape = 's32[1]{0}', space=sflag, size = 0x4, scoped, tag = 'scoped memory for tpu_custom_call.1']
    #allocation4 [shape = 's32[1]{0}', space=sflag, size = 0x4, scoped, tag = 'scoped memory for tpu_custom_call.1']
    #allocation5 [shape = 'u8[16384]{0}', space=vmem, size = 0x4000, scoped, tag = 'input window, operand 1, single buffered']
    #allocation6 [shape = 's32[1]{0}', space=sflag, size = 0x4, scoped, tag = 'scoped memory for tpu_custom_call.1']
    #allocation7 [shape = 'u8[65536]{0}', space=vmem, size = 0x10000, scoped, tag = 'input window, operand 2, single buffered']
    #allocation8 [shape = 'u8[512]{0}', space=vmem, size = 0x400, scoped, tag = 'output window, operand 0, single buffered']
    %10 = vsyncpa [#allocation3], 0
    %11 = vsyncpa [#allocation6], 0
    %12 = vsyncpa [#allocation4], 0
    // Predicated region
    $region2: #{tpu_custom_call.1} parent=1 // pred_check
      _
    $region3: #{tpu_custom_call.1} parent=1 // pred_check_branch
      %14 = sbr.rel (0) target = $region5
    $region4: #{tpu_custom_call.1} parent=1 // pred_region
      %s16 = ssub.s32 64, 64
      %17 = vsyncadd [#allocation3], %s16
      %s19 = sshll.u32 [#allocation2], 4
      %s20 = int_to_ptr.vmem [resolvable:$true] %s19
      %22 = dma.hbm_to_vmem [thread:$0]  %s0, 64, %s20, [#allocation3]
    $region5: #{tpu_custom_call.1} parent=1 // pred_fallthru
      _
    // Predicated region
    $region6: #{tpu_custom_call.1} parent=1 // pred_check
      _
    $region7: #{tpu_custom_call.1} parent=1 // pred_check_branch
      %24 = sbr.rel (0) target = $region9
    $region8: #{tpu_custom_call.1} parent=1 // pred_region
      %s26 = ssub.s32 512, 512
      %27 = vsyncadd [#allocation6], %s26
      %s28 = sshll.u32 [#allocation5], 4
      %s29 = int_to_ptr.vmem [resolvable:$true] %s28
      %34 = dma.hbm_to_vmem [thread:$0]  %s1, 512, %s29, [#allocation6], 64, 64, 4
    $region9: #{tpu_custom_call.1} parent=1 // pred_fallthru
      _
    // Predicated region
    $region10: #{tpu_custom_call.1} parent=1 // pred_check
      _
    $region11: #{tpu_custom_call.1} parent=1 // pred_check_branch
      %36 = sbr.rel (0) target = $region13
    $region12: #{tpu_custom_call.1} parent=1 // pred_region
      %s38 = ssub.s32 2048, 2048
      %39 = vsyncadd [#allocation6], %s38
      %s40 = sshll.u32 [#allocation7], 4
      %s41 = int_to_ptr.vmem [resolvable:$true] %s40
      %46 = dma.hbm_to_vmem [thread:$0]  %s2, 2048, %s41, [#allocation6], 64, 64, 4
    $region13: #{tpu_custom_call.1} parent=1 // pred_fallthru
      _
    // Predicated region
    $region14: #{tpu_custom_call.1} parent=1 // pred_check
      _
    $region15: #{tpu_custom_call.1} parent=1 // pred_check_branch
      %48 = sbr.rel (0) target = $region17
    $region16: #{tpu_custom_call.1} parent=1 // pred_region
      _
    $region17: #{tpu_custom_call.1} parent=1 // pred_fallthru
      _
    // Predicated region
    $region18: #{tpu_custom_call.1} parent=1 // pred_check
      _
    $region19: #{tpu_custom_call.1} parent=1 // pred_check_branch
      %50 = sbr.rel (0) target = $region21
    $region20: #{tpu_custom_call.1} parent=1 // pred_region
      _
    $region21: #{tpu_custom_call.1} parent=1 // pred_fallthru
      _
    // Predicated region
    $region22: #{tpu_custom_call.1} parent=1 // pred_check
      _
    $region23: #{tpu_custom_call.1} parent=1 // pred_check_branch
      %52 = sbr.rel (0) target = $region25
    $region24: #{tpu_custom_call.1} parent=1 // pred_region
      %53 = dma.done [#allocation3], 64
    $region25: #{tpu_custom_call.1} parent=1 // pred_fallthru
      _
    // Predicated region
    $region26: #{tpu_custom_call.1} parent=1 // pred_check
      _
    $region27: #{tpu_custom_call.1} parent=1 // pred_check_branch
      %55 = sbr.rel (0) target = $region29
    $region28: #{tpu_custom_call.1} parent=1 // pred_region
      %56 = dma.done [#allocation6], 512
    $region29: #{tpu_custom_call.1} parent=1 // pred_fallthru
      _
    // Predicated region
    $region30: #{tpu_custom_call.1} parent=1 // pred_check
      _
    $region31: #{tpu_custom_call.1} parent=1 // pred_check_branch
      %58 = sbr.rel (0) target = $region33
    $region32: #{tpu_custom_call.1} parent=1 // pred_region
      %59 = dma.done [#allocation6], 2048
    $region33: #{tpu_custom_call.1} parent=1 // pred_fallthru
      _
    %v61 = vld [vmem:[#allocation2] sm:$0xf]
    %v62 = vld [vmem:[#allocation5] sm:$0xf]
    %v63 = vld [vmem:[#allocation5 + $0x4] sm:$0xf]
    %v64 = vld [vmem:[#allocation5 + $0x8] sm:$0xf]
    %v65 = vld [vmem:[#allocation5 + $0xc] sm:$0xf]
    %v66 = vld [vmem:[#allocation5 + $0x10] sm:$0xf]
    %v67 = vld [vmem:[#allocation5 + $0x14] sm:$0xf]
    %v68 = vld [vmem:[#allocation5 + $0x18] sm:$0xf]
    %v69 = vld [vmem:[#allocation5 + $0x1c] sm:$0xf]
    %v70 = vld [vmem:[%s4] sm:$0x1]
    %v71 = vlaneseq
    %v72 = vshrl.u32 %v71, 7
    %v73 = vsub.s32 0, %v72
    %v74 = vrot.slane %v70, %v73
    %v83 = vunpack.c.l.b16 %v62
    %v84 = vunpack.c.l.b16 %v63
    %v85 = vunpack.c.l.b16 %v64
    %v86 = vunpack.c.l.b16 %v65
    %v87 = vunpack.c.l.b16 %v66
    %v88 = vunpack.c.l.b16 %v67
    %v89 = vunpack.c.l.b16 %v68
    %v90 = vunpack.c.l.b16 %v69
    %v91 = vpack.c.b16 %v84, %v83
    %v92 = vpack.c.b16 %v86, %v85
    %v93 = vpack.c.b16 %v88, %v87
    %v94 = vpack.c.b16 %v90, %v89
    %vm99 = vcmask 523264
    %v101 = vsel %vm99, %v61, 0
    %103 = vmatprep.subr.bf16.mxu0 0
    %104 = vmatpush1.bf16.msra.mxu0 0
    %105 = vmatprep.subr.bf16.mxu0 0
    %106 = vmatpush1.bf16.msra.mxu0 0
    %107 = vmatprep.subr.bf16.mxu0 0
    %108 = vmatpush1.bf16.msra.mxu0 0
    %109 = vmatprep.subr.bf16.mxu0 0
    %110 = vmatpush1.bf16.msra.mxu0 0
    %111 = vmatprep.subr.bf16.mxu0 0
    %112 = vmatpush1.bf16.msra.mxu0 %v94
    %113 = vmatprep.subr.bf16.mxu0 0
    %114 = vmatpush1.bf16.msra.mxu0 %v93
    %115 = vmatprep.subr.bf16.mxu0 0
    %116 = vmatpush1.bf16.msra.mxu0 %v92
    %117 = vmatprep.subr.bf16.mxu0 0
    %118 = vmatpush1.bf16.msra.mxu0 %v91
    %119 = vmatprep.subr.bf16.mxu0 0
    %120 = vmatpush2.bf16.msra.mxu0 0
    %121 = vmatprep.subr.bf16.mxu0 0
    %122 = vmatpush2.bf16.msra.mxu0 0
    %123 = vmatprep.subr.bf16.mxu0 0
    %124 = vmatpush2.bf16.msra.mxu0 0
    %125 = vmatprep.subr.bf16.mxu0 0
    %126 = vmatpush2.bf16.msra.mxu0 0
    %127 = vmatprep.subr.bf16.mxu0 0
    %128 = vmatpush2.bf16.msra.mxu0 0
    %129 = vmatprep.subr.bf16.mxu0 0
    %130 = vmatpush2.bf16.msra.mxu0 0
    %131 = vmatprep.subr.bf16.mxu0 0
    %132 = vmatpush2.bf16.msra.mxu0 0
    %133 = vmatprep.subr.bf16.mxu0 0
    %134 = vmatpush2.bf16.msra.mxu0 0
    %135 = vmatprep.mubr.bf16.mxu0 0
    %136 = vmatmul.mubr.bf16.gmra.mxu0 %v101
    %v137 = vpop.f32.mrf.mxu0
    %v138 = vadd.f32 %v74, %v137
    %v139 = vpop.f32.mrf.mxu0
    %v140 = vpop.f32.mrf.mxu0
    %v141 = vpop.f32.mrf.mxu0
    %142 = vdwg.mxu0
    %vm143 = vcmp.gt.f32.partialorder %v138, 0.0
    %v144 = vmul.f32 %v138, 0.2
    %v145 = vsel %vm143, %v138, %v144
    %v146 = vpack.c.bf16 %v145, %v145
    %v147 = vld [vmem:[#allocation7] sm:$0xf]
    %v148 = vld [vmem:[#allocation7 + $0x4] sm:$0xf]
    %v149 = vld [vmem:[#allocation7 + $0x8] sm:$0xf]
    %v150 = vld [vmem:[#allocation7 + $0xc] sm:$0xf]
    %v151 = vld [vmem:[#allocation7 + $0x10] sm:$0xf]
    %v152 = vld [vmem:[#allocation7 + $0x14] sm:$0xf]
    %v153 = vld [vmem:[#allocation7 + $0x18] sm:$0xf]
    %v154 = vld [vmem:[#allocation7 + $0x1c] sm:$0xf]
    %v155 = vld [vmem:[#allocation7 + $0x20] sm:$0xf]
    %v156 = vld [vmem:[#allocation7 + $0x24] sm:$0xf]
    %v157 = vld [vmem:[#allocation7 + $0x28] sm:$0xf]
    %v158 = vld [vmem:[#allocation7 + $0x2c] sm:$0xf]
    %v159 = vld [vmem:[#allocation7 + $0x30] sm:$0xf]
    %v160 = vld [vmem:[#allocation7 + $0x34] sm:$0xf]
    %v161 = vld [vmem:[#allocation7 + $0x38] sm:$0xf]
    %v162 = vld [vmem:[#allocation7 + $0x3c] sm:$0xf]
    %v163 = vld [vmem:[%s4 + $0x1] sm:$0x1]
    %v164 = vlaneseq
    %v165 = vshrl.u32 %v164, 7
    %v166 = vsub.s32 0, %v165
    %v167 = vrot.slane %v163, %v166
    %v184 = vunpack.c.l.b16 %v147
    %v185 = vunpack.c.l.b16 %v148
    %v186 = vunpack.c.l.b16 %v149
    %v187 = vunpack.c.l.b16 %v150
    %v188 = vunpack.c.l.b16 %v151
    %v189 = vunpack.c.l.b16 %v152
    %v190 = vunpack.c.l.b16 %v153
    %v191 = vunpack.c.l.b16 %v154
    %v192 = vunpack.c.l.b16 %v155
    %v193 = vunpack.c.l.b16 %v156
    %v194 = vunpack.c.l.b16 %v157
    %v195 = vunpack.c.l.b16 %v158
    %v196 = vunpack.c.l.b16 %v159
    %v197 = vunpack.c.l.b16 %v160
    %v198 = vunpack.c.l.b16 %v161
    %v199 = vunpack.c.l.b16 %v162
    %v200 = vpack.c.b16 %v185, %v184
    %v201 = vpack.c.b16 %v187, %v186
    %v202 = vpack.c.b16 %v189, %v188
    %v203 = vpack.c.b16 %v191, %v190
    %v204 = vpack.c.b16 %v193, %v192
    %v205 = vpack.c.b16 %v195, %v194
    %v206 = vpack.c.b16 %v197, %v196
    %v207 = vpack.c.b16 %v199, %v198
    %216 = vmatprep.subr.bf16.mxu0 0
    %217 = vmatpush1.bf16.msra.mxu0 %v207
    %218 = vmatprep.subr.bf16.mxu0 0
    %219 = vmatpush1.bf16.msra.mxu0 %v206
    %220 = vmatprep.subr.bf16.mxu0 0
    %221 = vmatpush1.bf16.msra.mxu0 %v205
    %222 = vmatprep.subr.bf16.mxu0 0
    %223 = vmatpush1.bf16.msra.mxu0 %v204
    %224 = vmatprep.subr.bf16.mxu0 0
    %225 = vmatpush1.bf16.msra.mxu0 %v203
    %226 = vmatprep.subr.bf16.mxu0 0
    %227 = vmatpush1.bf16.msra.mxu0 %v202
    %228 = vmatprep.subr.bf16.mxu0 0
    %229 = vmatpush1.bf16.msra.mxu0 %v201
    %230 = vmatprep.subr.bf16.mxu0 0
    %231 = vmatpush1.bf16.msra.mxu0 %v200
    %232 = vmatprep.subr.bf16.mxu0 0
    %233 = vmatpush2.bf16.msra.mxu0 0
    %234 = vmatprep.subr.bf16.mxu0 0
    %235 = vmatpush2.bf16.msra.mxu0 0
    %236 = vmatprep.subr.bf16.mxu0 0
    %237 = vmatpush2.bf16.msra.mxu0 0
    %238 = vmatprep.subr.bf16.mxu0 0
    %239 = vmatpush2.bf16.msra.mxu0 0
    %240 = vmatprep.subr.bf16.mxu0 0
    %241 = vmatpush2.bf16.msra.mxu0 0
    %242 = vmatprep.subr.bf16.mxu0 0
    %243 = vmatpush2.bf16.msra.mxu0 0
    %244 = vmatprep.subr.bf16.mxu0 0
    %245 = vmatpush2.bf16.msra.mxu0 0
    %246 = vmatprep.subr.bf16.mxu0 0
    %247 = vmatpush2.bf16.msra.mxu0 0
    %248 = vmatprep.mubr.bf16.mxu0 0
    %249 = vmatmul.mubr.bf16.gmra.mxu0 %v146
    %v250 = vpop.f32.mrf.mxu0
    %v251 = vadd.f32 %v167, %v250
    %v252 = vpop.f32.mrf.mxu0
    %v253 = vpop.f32.mrf.mxu0
    %v254 = vpop.f32.mrf.mxu0
    %255 = vdwg.mxu0
    %vm256 = vcmp.gt.f32.partialorder %v251, 0.0
    %v257 = vmul.f32 %v251, 0.2
    %v258 = vsel %vm256, %v251, %v257
    %v259 = vpack.c.bf16 %v258, %v258
    %s260 = scalar_lea.vmem [#allocation7], 64
    %v261 = vld [vmem:[%s260] sm:$0xf]
    %v262 = vld [vmem:[%s260 + $0x4] sm:$0xf]
    %v263 = vld [vmem:[%s260 + $0x8] sm:$0xf]
    %v264 = vld [vmem:[%s260 + $0xc] sm:$0xf]
    %v265 = vld [vmem:[%s260 + $0x10] sm:$0xf]
    %v266 = vld [vmem:[%s260 + $0x14] sm:$0xf]
    %v267 = vld [vmem:[%s260 + $0x18] sm:$0xf]
    %v268 = vld [vmem:[%s260 + $0x1c] sm:$0xf]
    %v269 = vld [vmem:[%s260 + $0x20] sm:$0xf]
    %v270 = vld [vmem:[%s260 + $0x24] sm:$0xf]
    %v271 = vld [vmem:[%s260 + $0x28] sm:$0xf]
    %v272 = vld [vmem:[%s260 + $0x2c] sm:$0xf]
    %v273 = vld [vmem:[%s260 + $0x30] sm:$0xf]
    %v274 = vld [vmem:[%s260 + $0x34] sm:$0xf]
    %v275 = vld [vmem:[%s260 + $0x38] sm:$0xf]
    %v276 = vld [vmem:[%s260 + $0x3c] sm:$0xf]
    %v277 = vld [vmem:[%s4 + $0x2] sm:$0x1]
    %v278 = vlaneseq
    %v279 = vshrl.u32 %v278, 7
    %v280 = vsub.s32 0, %v279
    %v281 = vrot.slane %v277, %v280
    %v298 = vunpack.c.l.b16 %v261
    %v299 = vunpack.c.l.b16 %v262
    %v300 = vunpack.c.l.b16 %v263
    %v301 = vunpack.c.l.b16 %v264
    %v302 = vunpack.c.l.b16 %v265
    %v303 = vunpack.c.l.b16 %v266
    %v304 = vunpack.c.l.b16 %v267
    %v305 = vunpack.c.l.b16 %v268
    %v306 = vunpack.c.l.b16 %v269
    %v307 = vunpack.c.l.b16 %v270
    %v308 = vunpack.c.l.b16 %v271
    %v309 = vunpack.c.l.b16 %v272
    %v310 = vunpack.c.l.b16 %v273
    %v311 = vunpack.c.l.b16 %v274
    %v312 = vunpack.c.l.b16 %v275
    %v313 = vunpack.c.l.b16 %v276
    %v314 = vpack.c.b16 %v299, %v298
    %v315 = vpack.c.b16 %v301, %v300
    %v316 = vpack.c.b16 %v303, %v302
    %v317 = vpack.c.b16 %v305, %v304
    %v318 = vpack.c.b16 %v307, %v306
    %v319 = vpack.c.b16 %v309, %v308
    %v320 = vpack.c.b16 %v311, %v310
    %v321 = vpack.c.b16 %v313, %v312
    %330 = vmatprep.subr.bf16.mxu0 0
    %331 = vmatpush1.bf16.msra.mxu0 %v321
    %332 = vmatprep.subr.bf16.mxu0 0
    %333 = vmatpush1.bf16.msra.mxu0 %v320
    %334 = vmatprep.subr.bf16.mxu0 0
    %335 = vmatpush1.bf16.msra.mxu0 %v319
    %336 = vmatprep.subr.bf16.mxu0 0
    %337 = vmatpush1.bf16.msra.mxu0 %v318
    %338 = vmatprep.subr.bf16.mxu0 0
    %339 = vmatpush1.bf16.msra.mxu0 %v317
    %340 = vmatprep.subr.bf16.mxu0 0
    %341 = vmatpush1.bf16.msra.mxu0 %v316
    %342 = vmatprep.subr.bf16.mxu0 0
    %343 = vmatpush1.bf16.msra.mxu0 %v315
    %344 = vmatprep.subr.bf16.mxu0 0
    %345 = vmatpush1.bf16.msra.mxu0 %v314
    %346 = vmatprep.subr.bf16.mxu0 0
    %347 = vmatpush2.bf16.msra.mxu0 0
    %348 = vmatprep.subr.bf16.mxu0 0
    %349 = vmatpush2.bf16.msra.mxu0 0
    %350 = vmatprep.subr.bf16.mxu0 0
    %351 = vmatpush2.bf16.msra.mxu0 0
    %352 = vmatprep.subr.bf16.mxu0 0
    %353 = vmatpush2.bf16.msra.mxu0 0
    %354 = vmatprep.subr.bf16.mxu0 0
    %355 = vmatpush2.bf16.msra.mxu0 0
    %356 = vmatprep.subr.bf16.mxu0 0
    %357 = vmatpush2.bf16.msra.mxu0 0
    %358 = vmatprep.subr.bf16.mxu0 0
    %359 = vmatpush2.bf16.msra.mxu0 0
    %360 = vmatprep.subr.bf16.mxu0 0
    %361 = vmatpush2.bf16.msra.mxu0 0
    %362 = vmatprep.mubr.bf16.mxu0 0
    %363 = vmatmul.mubr.bf16.gmra.mxu0 %v259
    %v364 = vpop.f32.mrf.mxu0
    %v365 = vadd.f32 %v281, %v364
    %v366 = vpop.f32.mrf.mxu0
    %v367 = vpop.f32.mrf.mxu0
    %v368 = vpop.f32.mrf.mxu0
    %369 = vdwg.mxu0
    %vm370 = vcmp.gt.f32.partialorder %v365, 0.0
    %v371 = vmul.f32 %v365, 0.2
    %v372 = vsel %vm370, %v365, %v371
    %v373 = vld [vmem:[%s3] sm:$0x1]
    %v374 = vld [vmem:[%s4 + $0x3] sm:$0x1]
    %376 = vset.pattern.permute.xlu0 0
    %377 = vperm.xlu0 %376, %v374
    %v378 = vpop.permute.xlu0 %377
    %380 = vmatprep.subr.mxu0 0.0
    %381 = vmatpush1.xpose.msra.mxu0 0.0
    %382 = vmatprep.subr.mxu0 0.0
    %383 = vmatpush1.xpose.msra.mxu0 0.0
    %384 = vmatprep.subr.mxu0 0.0
    %385 = vmatpush1.xpose.msra.mxu0 0.0
    %386 = vmatprep.subr.mxu0 0.0
    %387 = vmatpush1.xpose.msra.mxu0 0.0
    %388 = vmatprep.subr.mxu0 0.0
    %389 = vmatpush1.xpose.msra.mxu0 0.0
    %390 = vmatprep.subr.mxu0 0.0
    %391 = vmatpush1.xpose.msra.mxu0 0.0
    %392 = vmatprep.subr.mxu0 0.0
    %393 = vmatpush1.xpose.msra.mxu0 0.0
    %394 = vmatprep.subr.mxu0 0.0
    %395 = vmatpush1.xpose.msra.mxu0 0.0
    %396 = vmatprep.subr.mxu0 0.0
    %397 = vmatpush1.xpose.msra.mxu0 0.0
    %398 = vmatprep.subr.mxu0 0.0
    %399 = vmatpush1.xpose.msra.mxu0 0.0
    %400 = vmatprep.subr.mxu0 0.0
    %401 = vmatpush1.xpose.msra.mxu0 0.0
    %402 = vmatprep.subr.mxu0 0.0
    %403 = vmatpush1.xpose.msra.mxu0 0.0
    %404 = vmatprep.subr.mxu0 0.0
    %405 = vmatpush1.xpose.msra.mxu0 0.0
    %406 = vmatprep.subr.mxu0 0.0
    %407 = vmatpush1.xpose.msra.mxu0 0.0
    %408 = vmatprep.subr.mxu0 0.0
    %409 = vmatpush1.xpose.msra.mxu0 0.0
    %410 = vmatprep.subr.mxu0 0.0
    %411 = vmatpush1.xpose.msra.mxu0 %v372
    %412 = vmatprep.subr.mxu0 0.0
    %413 = vmatpush2.xpose.msra.mxu0 0.0
    %414 = vmatprep.subr.mxu0 0.0
    %415 = vmatpush2.xpose.msra.mxu0 0.0
    %416 = vmatprep.subr.mxu0 0.0
    %417 = vmatpush2.xpose.msra.mxu0 0.0
    %418 = vmatprep.subr.mxu0 0.0
    %419 = vmatpush2.xpose.msra.mxu0 0.0
    %420 = vmatprep.subr.mxu0 0.0
    %421 = vmatpush2.xpose.msra.mxu0 0.0
    %422 = vmatprep.subr.mxu0 0.0
    %423 = vmatpush2.xpose.msra.mxu0 0.0
    %424 = vmatprep.subr.mxu0 0.0
    %425 = vmatpush2.xpose.msra.mxu0 0.0
    %426 = vmatprep.subr.mxu0 0.0
    %427 = vmatpush2.xpose.msra.mxu0 0.0
    %428 = vmatprep.subr.mxu0 0.0
    %429 = vmatpush2.xpose.msra.mxu0 0.0
    %430 = vmatprep.subr.mxu0 0.0
    %431 = vmatpush2.xpose.msra.mxu0 0.0
    %432 = vmatprep.subr.mxu0 0.0
    %433 = vmatpush2.xpose.msra.mxu0 0.0
    %434 = vmatprep.subr.mxu0 0.0
    %435 = vmatpush2.xpose.msra.mxu0 0.0
    %436 = vmatprep.subr.mxu0 0.0
    %437 = vmatpush2.xpose.msra.mxu0 0.0
    %438 = vmatprep.subr.mxu0 0.0
    %439 = vmatpush2.xpose.msra.mxu0 0.0
    %440 = vmatprep.subr.mxu0 0.0
    %441 = vmatpush2.xpose.msra.mxu0 0.0
    %442 = vmatprep.subr.mxu0 0.0
    %443 = vmatpush2.xpose.msra.mxu0 0.0
    %444 = vmatprep.mubr.f32.mxu0 0.0
    %445 = vmatmul.mubr.f32.gmra.mxu0 %v373
    %v446 = vpop.f32.mrf.mxu0
    %v447 = vadd.f32 %v378, %v446
    %v448 = vpop.f32.mrf.mxu0
    %449 = vdwg.mxu0
    %vm450 = vcmask 57344
    %451 = vst.msk [vmem:[#allocation8] sm:$0x1] %vm450, %v447
    // Predicated region
    $region34: #{tpu_custom_call.1} parent=1 // pred_check
      _
    $region35: #{tpu_custom_call.1} parent=1 // pred_check_branch
      %453 = sbr.rel (0) target = $region37
    $region36: #{tpu_custom_call.1} parent=1 // pred_region
      %s455 = ssub.s32 16, 16
      %456 = vsyncadd [#allocation4], %s455
      %s458 = sshll.u32 [#allocation8], 4
      %s459 = int_to_ptr.vmem [resolvable:$true] %s458
      %461 = dma.vmem_to_hbm [thread:$0]  %s459, 16, %s5, [#allocation4]
    $region37: #{tpu_custom_call.1} parent=1 // pred_fallthru
      _
    // Predicated region
    $region38: #{tpu_custom_call.1} parent=1 // pred_check
      _
    $region39: #{tpu_custom_call.1} parent=1 // pred_check_branch
      %463 = sbr.rel (0) target = $region41
    $region40: #{tpu_custom_call.1} parent=1 // pred_region
      %464 = dma.done [#allocation4], 16
    $region41: #{tpu_custom_call.1} parent=1 // pred_fallthru
      _
    %465 = vsyncpa [#allocation3], 1
    %466 = vsyncpa [#allocation6], 1
    %467 = vsyncpa [#allocation4], 1

</llo_original>
